<compile_context>
chip_gen: v7x
topology: tpu7x:2x2x1
jax: 0.10.0
libtpu: 0.0.40
codegen_flags: <defaults>
</compile_context>

<pallas_src>
import jax
import jax.numpy as jnp
from jax.experimental import pallas as pl
from jax.experimental.pallas import tpu as pltpu


# ---------------------------------------------------------------------------
# helpers
# ---------------------------------------------------------------------------
def _round_up(n, m):
    return ((n + m - 1) // m) * m


def _pad_to(a, rows, cols):
    a = a.astype(jnp.float32)
    return jnp.pad(a, ((0, rows - a.shape[0]), (0, cols - a.shape[1])))


def _unpack_weight_refs(refs, n_enc, n_dec):
    """Weight-ref order: encoder pairs, encoder_prior pairs,
    (w_x1, w_x2, w_t, b0) for the split decoder layer 0, remaining decoder
    pairs."""
    refs = list(refs)

    def pop_pairs(n):
        out = []
        for _ in range(n):
            w = refs.pop(0)
            b = refs.pop(0)
            out.append((w, b))
        return out

    enc = pop_pairs(n_enc)
    encp = pop_pairs(n_enc)
    w_x1 = refs.pop(0)
    w_x2 = refs.pop(0)
    w_t = refs.pop(0)
    b0 = refs.pop(0)
    dec_rest = pop_pairs(n_dec - 1)
    assert not refs
    return enc, encp, w_x1, w_x2, w_t, b0, dec_rest


def _mlp(h, layers):
    # ReLU after every layer except the last (final_activation=None).
    for li, (w, b) in enumerate(layers):
        h = jnp.dot(h, w[...], preferred_element_type=jnp.float32) + b[...]
        if li < len(layers) - 1:
            h = jnp.maximum(h, 0.0)
    return h


def _predict_noise(x, p, t, enc, encp, w_x1, w_x2, w_t, b0, dec_rest):
    """Fused _noise_prediction. `t` may be a scalar (get_sample path) or a
    (tile_b, 1) column (reconstruction path); broadcasting covers both."""
    x1 = _mlp(x, enc)        # encoder(inputs)
    x2 = _mlp(p, encp)       # encoder_prior(obfuscation_prior)
    # decoder layer 0 == concat([x1, x2, t], -1) @ W0 + b0, with W0 row-split.
    h = (jnp.dot(x1, w_x1[...], preferred_element_type=jnp.float32)
         + jnp.dot(x2, w_x2[...], preferred_element_type=jnp.float32)
         + t * w_t[...]
         + b0[...])
    if dec_rest:
        h = jnp.maximum(h, 0.0)
        for li, (w, b) in enumerate(dec_rest):
            h = jnp.dot(h, w[...], preferred_element_type=jnp.float32) + b[...]
            if li < len(dec_rest) - 1:
                h = jnp.maximum(h, 0.0)
    return h


# ---------------------------------------------------------------------------
# kernels
# ---------------------------------------------------------------------------
def _make_noise_pred_kernel(n_enc, n_dec):
    def kernel(x_ref, p_ref, t_ref, *rest):
        out_ref = rest[-1]
        weights = _unpack_weight_refs(rest[:-1], n_enc, n_dec)
        t = t_ref[:, 0:1]
        out_ref[...] = _predict_noise(x_ref[...], p_ref[...], t, *weights)
    return kernel


def _make_recon_kernel(n_enc, n_dec):
    def kernel(x_ref, p_ref, noise_ref, scal_ref, *rest):
        out_ref = rest[-1]
        weights = _unpack_weight_refs(rest[:-1], n_enc, n_dec)
        s1 = scal_ref[:, 0:1]      # sqrt(alpha_bar[t])
        s2 = scal_ref[:, 1:2]      # sqrt(1 - alpha_bar[t])
        t = scal_ref[:, 2:3]       # t / total_time
        noisy = x_ref[...] * s1 + noise_ref[...] * s2
        pred = _predict_noise(noisy, p_ref[...], t, *weights)
        out_ref[...] = noisy - pred
    return kernel


def _make_sample_kernel(n_enc, n_dec):
    def kernel(tfrac_ref, mfac_ref, isa_ref, sigma_ref,   # SMEM scalar prefetch
               res0_ref, p_ref, z_ref, *rest):
        res_sc = rest[-1]          # VMEM scratch: running sample (carried over s)
        out_ref = rest[-2]
        weights = _unpack_weight_refs(rest[:-2], n_enc, n_dec)
        s = pl.program_id(1)       # step s corresponds to diffusion index T-1-s

        @pl.when(s == 0)
        def _():
            res_sc[...] = res0_ref[...]

        r = res_sc[...]
        pred = _predict_noise(r, p_ref[...], tfrac_ref[s], *weights)
        r = (r - mfac_ref[s] * pred) * isa_ref[s] + sigma_ref[s] * z_ref[0]
        res_sc[...] = r

        @pl.when(s == pl.num_programs(1) - 1)
        def _():
            out_ref[...] = r
    return kernel


# ---------------------------------------------------------------------------
# module
# ---------------------------------------------------------------------------
class DiffusionReconstructionMapper:
    def __init__(self, mlp_sizes, embed_dim, total_time=100, num_points=1,
                 key=None):
        if len(mlp_sizes) % 2 == 0:
            raise ValueError("mlp_sizes must have odd length")
        n_half = len(mlp_sizes) // 2
        enc_sizes = list(mlp_sizes[:n_half])
        self.latent_dim = int(mlp_sizes[n_half])
        dec_sizes = list(mlp_sizes[n_half + 1:])
        self.embed_dim = int(embed_dim)
        self.total_time = int(total_time)
        self.num_points = int(num_points)

        key = jax.random.PRNGKey(0) if key is None else key

        # NOTE: deterministic init; not bit-identical to torch.nn.Linear defaults.
        def init_mlp(key, in_dim, hidden, out_dim):
            dims = [in_dim] + list(hidden) + [out_dim]
            params = []
            for i in range(len(dims) - 1):
                key, kw, kb = jax.random.split(key, 3)
                w = (jax.random.normal(kw, (dims[i], dims[i + 1]), jnp.float32)
                     / jnp.sqrt(float(dims[i])))
                b = jax.random.normal(kb, (1, dims[i + 1]), jnp.float32) * 0.01
                params.append((w, b))
            return key, params

        key, self.enc_params_raw = init_mlp(key, embed_dim, enc_sizes,
                                            self.latent_dim)
        key, self.encp_params_raw = init_mlp(key, embed_dim, enc_sizes,
                                             self.latent_dim)
        key, self.dec_params_raw = init_mlp(key, 2 * self.latent_dim + 1,
                                            dec_sizes, embed_dim)
        self.n_enc_layers = len(self.enc_params_raw)
        self.n_dec_layers = len(self.dec_params_raw)

        # diffusion schedule
        self.betas = jnp.linspace(1e-4, 0.02, self.total_time)
        self.alphas = 1.0 - self.betas
        self.alphas_bar = jnp.cumprod(self.alphas)

        # ---- lane-dense padding: all feature dims -> multiples of 128 -------
        self.embed_p = _round_up(self.embed_dim, 128)
        self.latent_p = _round_up(self.latent_dim, 128)

        def pad_layers(params):
            out = []
            for w, b in params:
                rp = _round_up(w.shape[0], 128)
                cp = _round_up(w.shape[1], 128)
                out.append((_pad_to(w, rp, cp), _pad_to(b, 1, cp)))
            return out

        enc_p = pad_layers(self.enc_params_raw)
        encp_p = pad_layers(self.encp_params_raw)
        dec_rest_p = pad_layers(self.dec_params_raw[1:])

        # decoder layer 0: rows [0:L) -> x1, [L:2L) -> x2, [2L] -> t
        w0, b0 = self.dec_params_raw[0]
        L = self.latent_dim
        c0p = _round_up(w0.shape[1], 128)
        w_x1 = _pad_to(w0[:L], self.latent_p, c0p)
        w_x2 = _pad_to(w0[L:2 * L], self.latent_p, c0p)
        w_t = _pad_to(w0[2 * L:2 * L + 1], 1, c0p)
        b0_p = _pad_to(b0, 1, c0p)

        # TODO(synk): pack the many tiny weight/bias arrays into one contiguous
        # VMEM buffer (static in-kernel offsets) to cut DMA-descriptor count.
        flat = []
        for w, b in enc_p:
            flat += [w, b]
        for w, b in encp_p:
            flat += [w, b]
        flat += [w_x1, w_x2, w_t, b0_p]
        for w, b in dec_rest_p:
            flat += [w, b]
        self.flat_weights = flat

        self._np_kernel = _make_noise_pred_kernel(self.n_enc_layers,
                                                  self.n_dec_layers)
        self._recon_kernel = _make_recon_kernel(self.n_enc_layers,
                                                self.n_dec_layers)
        self._sample_kernel = _make_sample_kernel(self.n_enc_layers,
                                                  self.n_dec_layers)

    # ---- module semantics ---------------------------------------------------
    def forward(self, x):
        # forward(x) == x in the PyTorch module; no copy kernel needed.
        return x

    # ---- tiling -------------------------------------------------------------
    def _batch_tiling(self, batch):
        # Batch tile: multiple of 8 sublanes, capped at 128 rows so resident
        # weights + double-buffered data tiles fit v7x's 64 MiB VMEM budget
        # (and trivially v5e/v6e's 128 MiB).
        tile_b = min(128, _round_up(batch, 8))
        bp = _round_up(batch, tile_b)
        return tile_b, bp

    def _weight_specs(self, index_map):
        # Constant index maps -> weights stay VMEM-resident across the grid.
        return [pl.BlockSpec(w.shape, index_map) for w in self.flat_weights]

    # ---- fused noise prediction (batch-gridded) -----------------------------
    def _noise_prediction(self, inputs, prior, t):
        B, D = inputs.shape
        tile_b, bp = self._batch_tiling(B)
        dp = self.embed_p
        x_p = _pad_to(inputs, bp, dp)
        p_p = _pad_to(prior, bp, dp)
        t_p = jnp.zeros((bp, 128), jnp.float32).at[:B, 0:1].set(
            t.astype(jnp.float32))

        data_spec = pl.BlockSpec((tile_b, dp), lambda b: (b, 0))
        out = pl.pallas_call(
            self._np_kernel,
            out_shape=jax.ShapeDtypeStruct((bp, dp), jnp.float32),
            grid=(bp // tile_b,),
            in_specs=[data_spec, data_spec,
                      pl.BlockSpec((tile_b, 128), lambda b: (b, 0))]
                     + self._weight_specs(lambda b: (0, 0)),
            out_specs=data_spec,
            compiler_params=pltpu.CompilerParams(
                dimension_semantics=("parallel",)),
        )(x_p, p_p, t_p, *self.flat_weights)
        return out[:B, :D]

    # pure-JAX reference on the unpadded params (for correctness checks)
    def _noise_prediction_ref(self, x, p, t):
        def mlp(h, params):
            for li, (w, b) in enumerate(params):
                h = jnp.dot(h, w, precision=jax.lax.Precision.HIGHEST) + b
                if li < len(params) - 1:
                    h = jnp.maximum(h, 0.0)
            return h
        x1 = mlp(x, self.enc_params_raw)
        x2 = mlp(p, self.encp_params_raw)
        h = jnp.concatenate([x1, x2, t.astype(jnp.float32)], axis=-1)
        return mlp(h, self.dec_params_raw)

    # ---- reconstruction: prologue/epilogue fused into the kernel -------------
    def _get_reconstruction(self, inputs, obfuscation_prior, key):
        multiple = jnp.tile(inputs, (self.num_points, 1))
        prior = jnp.tile(obfuscation_prior, (self.num_points, 1))
        B, D = multiple.shape
        k1, k2 = jax.random.split(key)
        t = jax.random.randint(k1, (B,), 0, self.total_time)
        noise = jax.random.normal(k2, (B, D), jnp.float32)
        chosen = jnp.take(self.alphas_bar, t)
        s1 = jnp.sqrt(chosen)
        s2 = jnp.sqrt(1.0 - chosen)
        tf = t.astype(jnp.float32) / self.total_time

        tile_b, bp = self._batch_tiling(B)
        dp = self.embed_p
        x_p = _pad_to(multiple, bp, dp)
        p_p = _pad_to(prior, bp, dp)
        n_p = _pad_to(noise, bp, dp)
        scal = (jnp.zeros((bp, 128), jnp.float32)
                .at[:B, 0].set(s1).at[:B, 1].set(s2).at[:B, 2].set(tf))

        data_spec = pl.BlockSpec((tile_b, dp), lambda b: (b, 0))
        out = pl.pallas_call(
            self._recon_kernel,
            out_shape=jax.ShapeDtypeStruct((bp, dp), jnp.float32),
            grid=(bp // tile_b,),
            in_specs=[data_spec, data_spec, data_spec,
                      pl.BlockSpec((tile_b, 128), lambda b: (b, 0))]
                     + self._weight_specs(lambda b: (0, 0)),
            out_specs=data_spec,
            compiler_params=pltpu.CompilerParams(
                dimension_semantics=("parallel",)),
        )(x_p, p_p, n_p, scal, *self.flat_weights)
        return out[:B, :D]

    # ---- sampling: whole diffusion loop in ONE pallas_call -------------------
    def get_sample(self, obfuscated_prior, key, training=False):
        B, D = obfuscated_prior.shape
        T = self.total_time
        tile_b, bp = self._batch_tiling(B)
        dp = self.embed_p

        k0, kz = jax.random.split(key)
        res0 = jax.random.normal(k0, (bp, dp), jnp.float32)
        z = jax.random.normal(kz, (T, bp, dp), jnp.float32)

        # step s of the grid == diffusion index i = T-1-s
        idx = jnp.arange(T - 1, -1, -1)
        t_frac = idx.astype(jnp.float32) / T
        mfac = (1.0 - self.alphas[idx]) / jnp.sqrt(1.0 - self.alphas_bar[idx])
        isa = 1.0 / jnp.sqrt(self.alphas[idx])
        sigma = jnp.sqrt(self.betas[idx])
        z = jnp.where((idx > 1)[:, None, None], z, 0.0)

        p_p = _pad_to(obfuscated_prior, bp, dp)

        cidx = lambda b, s, *_: (b, 0)
        grid_spec = pltpu.PrefetchScalarGridSpec(
            num_scalar_prefetch=4,
            grid=(bp // tile_b, T),
            in_specs=[pl.BlockSpec((tile_b, dp), cidx),               # res0
                      pl.BlockSpec((tile_b, dp), cidx),               # prior
                      pl.BlockSpec((1, tile_b, dp),
                                   lambda b, s, *_: (s, b, 0))]       # z[step]
                     + self._weight_specs(lambda b, s, *_: (0, 0)),
            out_specs=pl.BlockSpec((tile_b, dp), cidx),
            scratch_shapes=[pltpu.VMEM((tile_b, dp), jnp.float32)])

        out = pl.pallas_call(
            self._sample_kernel,
            out_shape=jax.ShapeDtypeStruct((bp, dp), jnp.float32),
            grid_spec=grid_spec,
            compiler_params=pltpu.CompilerParams(
                dimension_semantics=("parallel", "arbitrary")),
        )(t_frac, mfac, isa, sigma, res0, p_p, z, *self.flat_weights)
        return out[:B, :D]

    # pure-JAX reference sampler using identical RNG draws (for testing)
    def _get_sample_ref(self, obfuscated_prior, key):
        B, D = obfuscated_prior.shape
        T = self.total_time
        tile_b, bp = self._batch_tiling(B)
        dp = self.embed_p
        k0, kz = jax.random.split(key)
        result = jax.random.normal(k0, (bp, dp), jnp.float32)[:B, :D]
        zs = jax.random.normal(kz, (T, bp, dp), jnp.float32)[:, :B, :D]
        for s in range(T):
            i = T - 1 - s
            z = zs[s] if i > 1 else jnp.zeros_like(result)
            sigma = jnp.sqrt(self.betas[i])
            mf = (1.0 - self.alphas[i]) / jnp.sqrt(1.0 - self.alphas_bar[i])
            t = jnp.full((B, 1), i / float(T), jnp.float32)
            result = result - mf * self._noise_prediction_ref(
                result, obfuscated_prior, t)
            result = result / jnp.sqrt(self.alphas[i]) + sigma * z
        return result


# ---------------------------------------------------------------------------
if __name__ == "__main__":
    key = jax.random.PRNGKey(0)
    batch, embed_dim = 8, 32
    mlp_sizes = [16, 8, 16]   # encoder [16], latent 8, decoder [16]
    total_time = 10

    kparams, kx, kp, kr, ks = jax.random.split(key, 5)
    mapper = DiffusionReconstructionMapper(
        mlp_sizes, embed_dim, total_time=total_time, num_points=1, key=kparams)

    x = jax.random.normal(kx, (batch, embed_dim), jnp.float32)
    prior = jax.random.normal(kp, (batch, embed_dim), jnp.float32)

    # forward(x) == x (exact module semantics; no kernel needed)
    y = mapper.forward(x)
    assert y.shape == x.shape and bool(jnp.allclose(y, x))

    # fused noise-prediction kernel vs pure-JAX reference
    t0 = jnp.full((batch, 1), 3.0 / total_time, jnp.float32)
    pred = jax.block_until_ready(mapper._noise_prediction(x, prior, t0))
    pred_ref = mapper._noise_prediction_ref(x, prior, t0)
    assert pred.shape == (batch, embed_dim)
    assert bool(jnp.allclose(pred, pred_ref, atol=5e-2, rtol=5e-2))

    # reconstruction with the elementwise prologue/epilogue fused in-kernel
    recon = jax.block_until_ready(mapper._get_reconstruction(x, prior, kr))
    assert recon.shape == (batch, embed_dim)
    assert bool(jnp.all(jnp.isfinite(recon)))

    # fully fused diffusion sampling loop (single pallas_call for all T steps)
    sample = jax.block_until_ready(mapper.get_sample(prior, ks))
    sample_ref = mapper._get_sample_ref(prior, ks)
    assert sample.shape == (batch, embed_dim)
    assert bool(jnp.allclose(sample, sample_ref, atol=5e-2, rtol=5e-2))

    print("KERNEL_OK")
</pallas_src>

<mosaic_0001>
module attributes {stable_mosaic.version = 11 : i64} {
  func.func @kernel(%arg0: i32, %arg1: memref<8x128xf32, #tpu.memory_space<vmem>>, %arg2: memref<8x128xf32, #tpu.memory_space<vmem>>, %arg3: memref<8x128xf32, #tpu.memory_space<vmem>>, %arg4: memref<128x128xf32, #tpu.memory_space<vmem>>, %arg5: memref<1x128xf32, #tpu.memory_space<vmem>>, %arg6: memref<128x128xf32, #tpu.memory_space<vmem>>, %arg7: memref<1x128xf32, #tpu.memory_space<vmem>>, %arg8: memref<128x128xf32, #tpu.memory_space<vmem>>, %arg9: memref<1x128xf32, #tpu.memory_space<vmem>>, %arg10: memref<128x128xf32, #tpu.memory_space<vmem>>, %arg11: memref<1x128xf32, #tpu.memory_space<vmem>>, %arg12: memref<128x128xf32, #tpu.memory_space<vmem>>, %arg13: memref<128x128xf32, #tpu.memory_space<vmem>>, %arg14: memref<1x128xf32, #tpu.memory_space<vmem>>, %arg15: memref<1x128xf32, #tpu.memory_space<vmem>>, %arg16: memref<128x128xf32, #tpu.memory_space<vmem>>, %arg17: memref<1x128xf32, #tpu.memory_space<vmem>>, %arg18: memref<8x128xf32, #tpu.memory_space<vmem>>) attributes {dimension_semantics = [#tpu.dimension_semantics<parallel>], iteration_bounds = array<i64: 1>, scalar_prefetch = 0 : i64, scratch_operands = 0 : i64, tpu.core_type = #tpu.core_type<tc>, window_params = [{transform_indices = @transform_0, window_bounds = array<i64: 8, 128>}, {transform_indices = @transform_1, window_bounds = array<i64: 8, 128>}, {transform_indices = @transform_2, window_bounds = array<i64: 8, 128>}, {pipeline_mode = #tpu.pipeline_mode<synchronous>, transform_indices = @transform_3, window_bounds = array<i64: 128, 128>}, {pipeline_mode = #tpu.pipeline_mode<synchronous>, transform_indices = @transform_4, window_bounds = array<i64: 1, 128>}, {pipeline_mode = #tpu.pipeline_mode<synchronous>, transform_indices = @transform_5, window_bounds = array<i64: 128, 128>}, {pipeline_mode = #tpu.pipeline_mode<synchronous>, transform_indices = @transform_6, window_bounds = array<i64: 1, 128>}, {pipeline_mode = #tpu.pipeline_mode<synchronous>, transform_indices = @transform_7, window_bounds = array<i64: 128, 128>}, {pipeline_mode = #tpu.pipeline_mode<synchronous>, transform_indices = @transform_8, window_bounds = array<i64: 1, 128>}, {pipeline_mode = #tpu.pipeline_mode<synchronous>, transform_indices = @transform_9, window_bounds = array<i64: 128, 128>}, {pipeline_mode = #tpu.pipeline_mode<synchronous>, transform_indices = @transform_10, window_bounds = array<i64: 1, 128>}, {pipeline_mode = #tpu.pipeline_mode<synchronous>, transform_indices = @transform_11, window_bounds = array<i64: 128, 128>}, {pipeline_mode = #tpu.pipeline_mode<synchronous>, transform_indices = @transform_12, window_bounds = array<i64: 128, 128>}, {pipeline_mode = #tpu.pipeline_mode<synchronous>, transform_indices = @transform_13, window_bounds = array<i64: 1, 128>}, {pipeline_mode = #tpu.pipeline_mode<synchronous>, transform_indices = @transform_14, window_bounds = array<i64: 1, 128>}, {pipeline_mode = #tpu.pipeline_mode<synchronous>, transform_indices = @transform_15, window_bounds = array<i64: 128, 128>}, {pipeline_mode = #tpu.pipeline_mode<synchronous>, transform_indices = @transform_16, window_bounds = array<i64: 1, 128>}, {transform_indices = @transform_17, window_bounds = array<i64: 8, 128>}]} {
    %c0 = arith.constant 0 : index
    %c0_0 = arith.constant 0 : index
    %0 = vector.load %arg3[%c0, %c0_0] : memref<8x128xf32, #tpu.memory_space<vmem>>, vector<8x1xf32>
    %c0_1 = arith.constant 0 : index
    %c0_2 = arith.constant 0 : index
    %1 = vector.load %arg1[%c0_1, %c0_2] : memref<8x128xf32, #tpu.memory_space<vmem>>, vector<8x128xf32>
    %c0_3 = arith.constant 0 : index
    %c0_4 = arith.constant 0 : index
    %2 = vector.load %arg2[%c0_3, %c0_4] : memref<8x128xf32, #tpu.memory_space<vmem>>, vector<8x128xf32>
    %c0_5 = arith.constant 0 : index
    %c0_6 = arith.constant 0 : index
    %3 = vector.load %arg4[%c0_5, %c0_6] : memref<128x128xf32, #tpu.memory_space<vmem>>, vector<128x128xf32>
    %cst = arith.constant dense<0.000000e+00> : vector<8x128xf32>
    %4 = tpu.matmul %1, %3, %cst {dimension_numbers = #tpu.dot_dimension_numbers<[1], [0], [0], [1], [0, 0, 1, 1], [], []>} : vector<8x128xf32>, vector<128x128xf32>, vector<8x128xf32> -> vector<8x128xf32>
    %c0_7 = arith.constant 0 : index
    %c0_8 = arith.constant 0 : index
    %5 = vector.load %arg5[%c0_7, %c0_8] : memref<1x128xf32, #tpu.memory_space<vmem>>, vector<1x128xf32>
    %6 = vector.broadcast %5 : vector<1x128xf32> to vector<8x128xf32>
    %7 = arith.addf %4, %6 : vector<8x128xf32>
    %cst_9 = arith.constant 0.000000e+00 : f32
    %8 = vector.broadcast %cst_9 : f32 to vector<8x128xf32>
    %9 = arith.maximumf %7, %8 : vector<8x128xf32>
    %c0_10 = arith.constant 0 : index
    %c0_11 = arith.constant 0 : index
    %10 = vector.load %arg6[%c0_10, %c0_11] : memref<128x128xf32, #tpu.memory_space<vmem>>, vector<128x128xf32>
    %cst_12 = arith.constant dense<0.000000e+00> : vector<8x128xf32>
    %11 = tpu.matmul %9, %10, %cst_12 {dimension_numbers = #tpu.dot_dimension_numbers<[1], [0], [0], [1], [0, 0, 1, 1], [], []>} : vector<8x128xf32>, vector<128x128xf32>, vector<8x128xf32> -> vector<8x128xf32>
    %c0_13 = arith.constant 0 : index
    %c0_14 = arith.constant 0 : index
    %12 = vector.load %arg7[%c0_13, %c0_14] : memref<1x128xf32, #tpu.memory_space<vmem>>, vector<1x128xf32>
    %13 = vector.broadcast %12 : vector<1x128xf32> to vector<8x128xf32>
    %14 = arith.addf %11, %13 : vector<8x128xf32>
    %c0_15 = arith.constant 0 : index
    %c0_16 = arith.constant 0 : index
    %15 = vector.load %arg8[%c0_15, %c0_16] : memref<128x128xf32, #tpu.memory_space<vmem>>, vector<128x128xf32>
    %cst_17 = arith.constant dense<0.000000e+00> : vector<8x128xf32>
    %16 = tpu.matmul %2, %15, %cst_17 {dimension_numbers = #tpu.dot_dimension_numbers<[1], [0], [0], [1], [0, 0, 1, 1], [], []>} : vector<8x128xf32>, vector<128x128xf32>, vector<8x128xf32> -> vector<8x128xf32>
    %c0_18 = arith.constant 0 : index
    %c0_19 = arith.constant 0 : index
    %17 = vector.load %arg9[%c0_18, %c0_19] : memref<1x128xf32, #tpu.memory_space<vmem>>, vector<1x128xf32>
    %18 = vector.broadcast %17 : vector<1x128xf32> to vector<8x128xf32>
    %19 = arith.addf %16, %18 : vector<8x128xf32>
    %cst_20 = arith.constant 0.000000e+00 : f32
    %20 = vector.broadcast %cst_20 : f32 to vector<8x128xf32>
    %21 = arith.maximumf %19, %20 : vector<8x128xf32>
    %c0_21 = arith.constant 0 : index
    %c0_22 = arith.constant 0 : index
    %22 = vector.load %arg10[%c0_21, %c0_22] : memref<128x128xf32, #tpu.memory_space<vmem>>, vector<128x128xf32>
    %cst_23 = arith.constant dense<0.000000e+00> : vector<8x128xf32>
    %23 = tpu.matmul %21, %22, %cst_23 {dimension_numbers = #tpu.dot_dimension_numbers<[1], [0], [0], [1], [0, 0, 1, 1], [], []>} : vector<8x128xf32>, vector<128x128xf32>, vector<8x128xf32> -> vector<8x128xf32>
    %c0_24 = arith.constant 0 : index
    %c0_25 = arith.constant 0 : index
    %24 = vector.load %arg11[%c0_24, %c0_25] : memref<1x128xf32, #tpu.memory_space<vmem>>, vector<1x128xf32>
    %25 = vector.broadcast %24 : vector<1x128xf32> to vector<8x128xf32>
    %26 = arith.addf %23, %25 : vector<8x128xf32>
    %c0_26 = arith.constant 0 : index
    %c0_27 = arith.constant 0 : index
    %27 = vector.load %arg12[%c0_26, %c0_27] : memref<128x128xf32, #tpu.memory_space<vmem>>, vector<128x128xf32>
    %cst_28 = arith.constant dense<0.000000e+00> : vector<8x128xf32>
    %28 = tpu.matmul %14, %27, %cst_28 {dimension_numbers = #tpu.dot_dimension_numbers<[1], [0], [0], [1], [0, 0, 1, 1], [], []>} : vector<8x128xf32>, vector<128x128xf32>, vector<8x128xf32> -> vector<8x128xf32>
    %c0_29 = arith.constant 0 : index
    %c0_30 = arith.constant 0 : index
    %29 = vector.load %arg13[%c0_29, %c0_30] : memref<128x128xf32, #tpu.memory_space<vmem>>, vector<128x128xf32>
    %cst_31 = arith.constant dense<0.000000e+00> : vector<8x128xf32>
    %30 = tpu.matmul %26, %29, %cst_31 {dimension_numbers = #tpu.dot_dimension_numbers<[1], [0], [0], [1], [0, 0, 1, 1], [], []>} : vector<8x128xf32>, vector<128x128xf32>, vector<8x128xf32> -> vector<8x128xf32>
    %31 = arith.addf %28, %30 : vector<8x128xf32>
    %c0_32 = arith.constant 0 : index
    %c0_33 = arith.constant 0 : index
    %32 = vector.load %arg14[%c0_32, %c0_33] : memref<1x128xf32, #tpu.memory_space<vmem>>, vector<1x128xf32>
    %33 = vector.broadcast %0 : vector<8x1xf32> to vector<8x128xf32>
    %34 = vector.broadcast %32 : vector<1x128xf32> to vector<8x128xf32>
    %35 = arith.mulf %33, %34 : vector<8x128xf32>
    %36 = arith.addf %31, %35 : vector<8x128xf32>
    %c0_34 = arith.constant 0 : index
    %c0_35 = arith.constant 0 : index
    %37 = vector.load %arg15[%c0_34, %c0_35] : memref<1x128xf32, #tpu.memory_space<vmem>>, vector<1x128xf32>
    %38 = vector.broadcast %37 : vector<1x128xf32> to vector<8x128xf32>
    %39 = arith.addf %36, %38 : vector<8x128xf32>
    %cst_36 = arith.constant 0.000000e+00 : f32
    %40 = vector.broadcast %cst_36 : f32 to vector<8x128xf32>
    %41 = arith.maximumf %39, %40 : vector<8x128xf32>
    %c0_37 = arith.constant 0 : index
    %c0_38 = arith.constant 0 : index
    %42 = vector.load %arg16[%c0_37, %c0_38] : memref<128x128xf32, #tpu.memory_space<vmem>>, vector<128x128xf32>
    %cst_39 = arith.constant dense<0.000000e+00> : vector<8x128xf32>
    %43 = tpu.matmul %41, %42, %cst_39 {dimension_numbers = #tpu.dot_dimension_numbers<[1], [0], [0], [1], [0, 0, 1, 1], [], []>} : vector<8x128xf32>, vector<128x128xf32>, vector<8x128xf32> -> vector<8x128xf32>
    %c0_40 = arith.constant 0 : index
    %c0_41 = arith.constant 0 : index
    %44 = vector.load %arg17[%c0_40, %c0_41] : memref<1x128xf32, #tpu.memory_space<vmem>>, vector<1x128xf32>
    %45 = vector.broadcast %44 : vector<1x128xf32> to vector<8x128xf32>
    %46 = arith.addf %43, %45 : vector<8x128xf32>
    %c0_42 = arith.constant 0 : index
    %c0_43 = arith.constant 0 : index
    %47 = vector.load %arg18[%c0_42, %c0_43] : memref<8x128xf32, #tpu.memory_space<vmem>>, vector<8x128xf32>
    tpu.vector_store %arg18[%c0_42, %c0_43], %46 {strides = array<i32>} : memref<8x128xf32, #tpu.memory_space<vmem>>, vector<8x128xf32>,
    return
  }
  func.func @transform_0(%arg0: i32) -> (i32, i32) {
    %c0_i32 = arith.constant 0 : i32
    %c0_i32_0 = arith.constant 0 : i32
    return %arg0, %c0_i32 : i32, i32
  }
  func.func @transform_1(%arg0: i32) -> (i32, i32) {
    %c0_i32 = arith.constant 0 : i32
    %c0_i32_0 = arith.constant 0 : i32
    return %arg0, %c0_i32 : i32, i32
  }
  func.func @transform_2(%arg0: i32) -> (i32, i32) {
    %c0_i32 = arith.constant 0 : i32
    %c0_i32_0 = arith.constant 0 : i32
    return %arg0, %c0_i32 : i32, i32
  }
  func.func @transform_3(%arg0: i32) -> (i32, i32) {
    %c0_i32 = arith.constant 0 : i32
    %c0_i32_0 = arith.constant 0 : i32
    %c0_i32_1 = arith.constant 0 : i32
    return %c0_i32, %c0_i32_0 : i32, i32
  }
  func.func @transform_4(%arg0: i32) -> (i32, i32) {
    %c0_i32 = arith.constant 0 : i32
    %c0_i32_0 = arith.constant 0 : i32
    %c0_i32_1 = arith.constant 0 : i32
    return %c0_i32, %c0_i32_0 : i32, i32
  }
  func.func @transform_5(%arg0: i32) -> (i32, i32) {
    %c0_i32 = arith.constant 0 : i32
    %c0_i32_0 = arith.constant 0 : i32
    %c0_i32_1 = arith.constant 0 : i32
    return %c0_i32, %c0_i32_0 : i32, i32
  }
  func.func @transform_6(%arg0: i32) -> (i32, i32) {
    %c0_i32 = arith.constant 0 : i32
    %c0_i32_0 = arith.constant 0 : i32
    %c0_i32_1 = arith.constant 0 : i32
    return %c0_i32, %c0_i32_0 : i32, i32
  }
  func.func @transform_7(%arg0: i32) -> (i32, i32) {
    %c0_i32 = arith.constant 0 : i32
    %c0_i32_0 = arith.constant 0 : i32
    %c0_i32_1 = arith.constant 0 : i32
    return %c0_i32, %c0_i32_0 : i32, i32
  }
  func.func @transform_8(%arg0: i32) -> (i32, i32) {
    %c0_i32 = arith.constant 0 : i32
    %c0_i32_0 = arith.constant 0 : i32
    %c0_i32_1 = arith.constant 0 : i32
    return %c0_i32, %c0_i32_0 : i32, i32
  }
  func.func @transform_9(%arg0: i32) -> (i32, i32) {
    %c0_i32 = arith.constant 0 : i32
    %c0_i32_0 = arith.constant 0 : i32
    %c0_i32_1 = arith.constant 0 : i32
    return %c0_i32, %c0_i32_0 : i32, i32
  }
  func.func @transform_10(%arg0: i32) -> (i32, i32) {
    %c0_i32 = arith.constant 0 : i32
    %c0_i32_0 = arith.constant 0 : i32
    %c0_i32_1 = arith.constant 0 : i32
    return %c0_i32, %c0_i32_0 : i32, i32
  }
  func.func @transform_11(%arg0: i32) -> (i32, i32) {
    %c0_i32 = arith.constant 0 : i32
    %c0_i32_0 = arith.constant 0 : i32
    %c0_i32_1 = arith.constant 0 : i32
    return %c0_i32, %c0_i32_0 : i32, i32
  }
  func.func @transform_12(%arg0: i32) -> (i32, i32) {
    %c0_i32 = arith.constant 0 : i32
    %c0_i32_0 = arith.constant 0 : i32
    %c0_i32_1 = arith.constant 0 : i32
    return %c0_i32, %c0_i32_0 : i32, i32
  }
  func.func @transform_13(%arg0: i32) -> (i32, i32) {
    %c0_i32 = arith.constant 0 : i32
    %c0_i32_0 = arith.constant 0 : i32
    %c0_i32_1 = arith.constant 0 : i32
    return %c0_i32, %c0_i32_0 : i32, i32
  }
  func.func @transform_14(%arg0: i32) -> (i32, i32) {
    %c0_i32 = arith.constant 0 : i32
    %c0_i32_0 = arith.constant 0 : i32
    %c0_i32_1 = arith.constant 0 : i32
    return %c0_i32, %c0_i32_0 : i32, i32
  }
  func.func @transform_15(%arg0: i32) -> (i32, i32) {
    %c0_i32 = arith.constant 0 : i32
    %c0_i32_0 = arith.constant 0 : i32
    %c0_i32_1 = arith.constant 0 : i32
    return %c0_i32, %c0_i32_0 : i32, i32
  }
  func.func @transform_16(%arg0: i32) -> (i32, i32) {
    %c0_i32 = arith.constant 0 : i32
    %c0_i32_0 = arith.constant 0 : i32
    %c0_i32_1 = arith.constant 0 : i32
    return %c0_i32, %c0_i32_0 : i32, i32
  }
  func.func @transform_17(%arg0: i32) -> (i32, i32) {
    %c0_i32 = arith.constant 0 : i32
    %c0_i32_0 = arith.constant 0 : i32
    return %arg0, %c0_i32 : i32, i32
  }
}

</mosaic_0001>

<llo_original>
// kernel: tpu_custom_call.1
$region0: #{tpu_custom_call.1}
  #allocation0 [shape = 'u32[]', space=smem, size = 0x4, offset = 0x4, fixed_abs, tag = 'smem constant byte address 0x4 - core index']
  #allocation1 [shape = 'u32[144,128]{1,0:T(1,128)}', space=vmem, size = 0x12000, scoped, tag = 'internal scratch']
  %s0 = inlined_call_operand.hbm [shape: f32[8,128], index: 0, kind: input, shape index: {}]
  %s1 = inlined_call_operand.hbm [shape: f32[8,128], index: 1, kind: input, shape index: {}]
  %s2 = inlined_call_operand.hbm [shape: f32[8,128], index: 2, kind: input, shape index: {}]
  %s3 = inlined_call_operand.hbm [shape: f32[128,128], index: 3, kind: input, shape index: {}]
  %s4 = inlined_call_operand.vmem [shape: f32[1,128], index: 4, kind: input, shape index: {}]
  %s5 = inlined_call_operand.hbm [shape: f32[128,128], index: 5, kind: input, shape index: {}]
  %s6 = inlined_call_operand.vmem [shape: f32[1,128], index: 6, kind: input, shape index: {}]
  %s7 = inlined_call_operand.hbm [shape: f32[128,128], index: 7, kind: input, shape index: {}]
  %s8 = inlined_call_operand.vmem [shape: f32[1,128], index: 8, kind: input, shape index: {}]
  %s9 = inlined_call_operand.hbm [shape: f32[128,128], index: 9, kind: input, shape index: {}]
  %s10 = inlined_call_operand.vmem [shape: f32[1,128], index: 10, kind: input, shape index: {}]
  %s11 = inlined_call_operand.hbm [shape: f32[128,128], index: 11, kind: input, shape index: {}]
  %s12 = inlined_call_operand.hbm [shape: f32[128,128], index: 12, kind: input, shape index: {}]
  %s13 = inlined_call_operand.vmem [shape: f32[1,128], index: 13, kind: input, shape index: {}]
  %s14 = inlined_call_operand.vmem [shape: f32[1,128], index: 14, kind: input, shape index: {}]
  %s15 = inlined_call_operand.hbm [shape: f32[128,128], index: 15, kind: input, shape index: {}]
  %s16 = inlined_call_operand.vmem [shape: f32[1,128], index: 16, kind: input, shape index: {}]
  %s17 = inlined_call_operand.hbm [shape: f32[8,128], index: 17, kind: output, shape index: {}]
  %s18 = sld [smem:[#allocation0]]
  $region118: #{tpu_custom_call.1} parent=0
    _
  %s20 = ssub.s32 1, %s18
  %s21 = scalar_select 0, %s20, %s18
  $region1: #{tpu_custom_call.1} parent=0
    #allocation2 [shape = 'u8[4096]{0}', space=vmem, size = 0x1000, scoped, tag = 'input window, operand 0, single buffered']
    #allocation3 [shape = 's32[1]{0}', space=sflag, size = 0x4, scoped, tag = 'scoped memory for tpu_custom_call.1']
    #allocation4 [shape = 's32[1]{0}', space=sflag, size = 0x4, scoped, tag = 'scoped memory for tpu_custom_call.1']
    #allocation5 [shape = 'u8[4096]{0}', space=vmem, size = 0x1000, scoped, tag = 'input window, operand 1, single buffered']
    #allocation6 [shape = 's32[1]{0}', space=sflag, size = 0x4, scoped, tag = 'scoped memory for tpu_custom_call.1']
    #allocation7 [shape = 'u8[4096]{0}', space=vmem, size = 0x1000, scoped, tag = 'input window, operand 2, single buffered']
    #allocation8 [shape = 'u8[65536]{0}', space=vmem, size = 0x10000, scoped, tag = 'input window, operand 3, single buffered']
    #allocation9 [shape = 's32[1]{0}', space=sflag, size = 0x4, scoped, tag = 'scoped memory for tpu_custom_call.1']
    #allocation10 [shape = 'u8[65536]{0}', space=vmem, size = 0x10000, scoped, tag = 'input window, operand 5, single buffered']
    #allocation11 [shape = 'u8[65536]{0}', space=vmem, size = 0x10000, scoped, tag = 'input window, operand 7, single buffered']
    #allocation12 [shape = 's32[1]{0}', space=sflag, size = 0x4, scoped, tag = 'scoped memory for tpu_custom_call.1']
    #allocation13 [shape = 'u8[65536]{0}', space=vmem, size = 0x10000, scoped, tag = 'input window, operand 9, single buffered']
    #allocation14 [shape = 'u8[65536]{0}', space=vmem, size = 0x10000, scoped, tag = 'input window, operand 11, single buffered']
    #allocation15 [shape = 's32[1]{0}', space=sflag, size = 0x4, scoped, tag = 'scoped memory for tpu_custom_call.1']
    #allocation16 [shape = 'u8[65536]{0}', space=vmem, size = 0x10000, scoped, tag = 'input window, operand 12, single buffered']
    #allocation17 [shape = 'u8[65536]{0}', space=vmem, size = 0x10000, scoped, tag = 'input window, operand 15, single buffered']
    #allocation18 [shape = 's32[1]{0}', space=sflag, size = 0x4, scoped, tag = 'scoped memory for tpu_custom_call.1']
    #allocation19 [shape = 'u8[4096]{0}', space=vmem, size = 0x1000, scoped, tag = 'output window, operand 0, single buffered']
    %22 = vsyncpa [#allocation3], 0
    %23 = vsyncpa [#allocation6], 0
    %24 = vsyncpa [#allocation9], 0
    %25 = vsyncpa [#allocation12], 0
    %26 = vsyncpa [#allocation15], 0
    %27 = vsyncpa [#allocation18], 0
    %28 = vsyncpa [#allocation4], 0
    // Predicated region
    $region2: #{tpu_custom_call.1} parent=1 // pred_check
      _
    $region3: #{tpu_custom_call.1} parent=1 // pred_check_branch
      %30 = sbr.rel (0) target = $region5
    $region4: #{tpu_custom_call.1} parent=1 // pred_region
      %s32 = ssub.s32 128, 128
      %33 = vsyncadd [#allocation3], %s32
      %s35 = sshll.u32 [#allocation2], 4
      %s36 = int_to_ptr.vmem [resolvable:$true] %s35
      %38 = dma.hbm_to_vmem [thread:$0]  %s0, 128, %s36, [#allocation3]
    $region5: #{tpu_custom_call.1} parent=1 // pred_fallthru
      _
    // Predicated region
    $region6: #{tpu_custom_call.1} parent=1 // pred_check
      _
    $region7: #{tpu_custom_call.1} parent=1 // pred_check_branch
      %40 = sbr.rel (0) target = $region9
    $region8: #{tpu_custom_call.1} parent=1 // pred_region
      %s42 = ssub.s32 128, 128
      %43 = vsyncadd [#allocation6], %s42
      %s45 = sshll.u32 [#allocation5], 4
      %s46 = int_to_ptr.vmem [resolvable:$true] %s45
      %48 = dma.hbm_to_vmem [thread:$0]  %s1, 128, %s46, [#allocation6]
    $region9: #{tpu_custom_call.1} parent=1 // pred_fallthru
      _
    // Predicated region
    $region10: #{tpu_custom_call.1} parent=1 // pred_check
      _
    $region11: #{tpu_custom_call.1} parent=1 // pred_check_branch
      %50 = sbr.rel (0) target = $region13
    $region12: #{tpu_custom_call.1} parent=1 // pred_region
      %s52 = ssub.s32 128, 128
      %53 = vsyncadd [#allocation6], %s52
      %s55 = sshll.u32 [#allocation7], 4
      %s56 = int_to_ptr.vmem [resolvable:$true] %s55
      %58 = dma.hbm_to_vmem [thread:$0]  %s2, 128, %s56, [#allocation6]
    $region13: #{tpu_custom_call.1} parent=1 // pred_fallthru
      _
    // Predicated region
    $region14: #{tpu_custom_call.1} parent=1 // pred_check
      _
    $region15: #{tpu_custom_call.1} parent=1 // pred_check_branch
      %60 = sbr.rel (0) target = $region17
    $region16: #{tpu_custom_call.1} parent=1 // pred_region
      %s62 = ssub.s32 2048, 2048
      %63 = vsyncadd [#allocation9], %s62
      %s64 = sshll.u32 [#allocation8], 4
      %s65 = int_to_ptr.vmem [resolvable:$true] %s64
      %70 = dma.hbm_to_vmem [thread:$0]  %s3, 2048, %s65, [#allocation9], 128, 128, 8
    $region17: #{tpu_custom_call.1} parent=1 // pred_fallthru
      _
    // Predicated region
    $region18: #{tpu_custom_call.1} parent=1 // pred_check
      _
    $region19: #{tpu_custom_call.1} parent=1 // pred_check_branch
      %72 = sbr.rel (0) target = $region21
    $region20: #{tpu_custom_call.1} parent=1 // pred_region
      _
    $region21: #{tpu_custom_call.1} parent=1 // pred_fallthru
      _
    // Predicated region
    $region22: #{tpu_custom_call.1} parent=1 // pred_check
      _
    $region23: #{tpu_custom_call.1} parent=1 // pred_check_branch
      %74 = sbr.rel (0) target = $region25
    $region24: #{tpu_custom_call.1} parent=1 // pred_region
      %s76 = ssub.s32 2048, 2048
      %77 = vsyncadd [#allocation9], %s76
      %s78 = sshll.u32 [#allocation10], 4
      %s79 = int_to_ptr.vmem [resolvable:$true] %s78
      %84 = dma.hbm_to_vmem [thread:$0]  %s5, 2048, %s79, [#allocation9], 128, 128, 8
    $region25: #{tpu_custom_call.1} parent=1 // pred_fallthru
      _
    // Predicated region
    $region26: #{tpu_custom_call.1} parent=1 // pred_check
      _
    $region27: #{tpu_custom_call.1} parent=1 // pred_check_branch
      %86 = sbr.rel (0) target = $region29
    $region28: #{tpu_custom_call.1} parent=1 // pred_region
      _
    $region29: #{tpu_custom_call.1} parent=1 // pred_fallthru
      _
    // Predicated region
    $region30: #{tpu_custom_call.1} parent=1 // pred_check
      _
    $region31: #{tpu_custom_call.1} parent=1 // pred_check_branch
      %88 = sbr.rel (0) target = $region33
    $region32: #{tpu_custom_call.1} parent=1 // pred_region
      %s90 = ssub.s32 2048, 2048
      %91 = vsyncadd [#allocation12], %s90
      %s92 = sshll.u32 [#allocation11], 4
      %s93 = int_to_ptr.vmem [resolvable:$true] %s92
      %98 = dma.hbm_to_vmem [thread:$0]  %s7, 2048, %s93, [#allocation12], 128, 128, 8
    $region33: #{tpu_custom_call.1} parent=1 // pred_fallthru
      _
    // Predicated region
    $region34: #{tpu_custom_call.1} parent=1 // pred_check
      _
    $region35: #{tpu_custom_call.1} parent=1 // pred_check_branch
      %100 = sbr.rel (0) target = $region37
    $region36: #{tpu_custom_call.1} parent=1 // pred_region
      _
    $region37: #{tpu_custom_call.1} parent=1 // pred_fallthru
      _
    // Predicated region
    $region38: #{tpu_custom_call.1} parent=1 // pred_check
      _
    $region39: #{tpu_custom_call.1} parent=1 // pred_check_branch
      %102 = sbr.rel (0) target = $region41
    $region40: #{tpu_custom_call.1} parent=1 // pred_region
      %s104 = ssub.s32 2048, 2048
      %105 = vsyncadd [#allocation12], %s104
      %s106 = sshll.u32 [#allocation13], 4
      %s107 = int_to_ptr.vmem [resolvable:$true] %s106
      %112 = dma.hbm_to_vmem [thread:$0]  %s9, 2048, %s107, [#allocation12], 128, 128, 8
    $region41: #{tpu_custom_call.1} parent=1 // pred_fallthru
      _
    // Predicated region
    $region42: #{tpu_custom_call.1} parent=1 // pred_check
      _
    $region43: #{tpu_custom_call.1} parent=1 // pred_check_branch
      %114 = sbr.rel (0) target = $region45
    $region44: #{tpu_custom_call.1} parent=1 // pred_region
      _
    $region45: #{tpu_custom_call.1} parent=1 // pred_fallthru
      _
    // Predicated region
    $region46: #{tpu_custom_call.1} parent=1 // pred_check
      _
    $region47: #{tpu_custom_call.1} parent=1 // pred_check_branch
      %116 = sbr.rel (0) target = $region49
    $region48: #{tpu_custom_call.1} parent=1 // pred_region
      %s118 = ssub.s32 2048, 2048
      %119 = vsyncadd [#allocation15], %s118
      %s120 = sshll.u32 [#allocation14], 4
      %s121 = int_to_ptr.vmem [resolvable:$true] %s120
      %126 = dma.hbm_to_vmem [thread:$0]  %s11, 2048, %s121, [#allocation15], 128, 128, 8
    $region49: #{tpu_custom_call.1} parent=1 // pred_fallthru
      _
    // Predicated region
    $region50: #{tpu_custom_call.1} parent=1 // pred_check
      _
    $region51: #{tpu_custom_call.1} parent=1 // pred_check_branch
      %128 = sbr.rel (0) target = $region53
    $region52: #{tpu_custom_call.1} parent=1 // pred_region
      %s130 = ssub.s32 2048, 2048
      %131 = vsyncadd [#allocation15], %s130
      %s132 = sshll.u32 [#allocation16], 4
      %s133 = int_to_ptr.vmem [resolvable:$true] %s132
      %138 = dma.hbm_to_vmem [thread:$0]  %s12, 2048, %s133, [#allocation15], 128, 128, 8
    $region53: #{tpu_custom_call.1} parent=1 // pred_fallthru
      _
    // Predicated region
    $region54: #{tpu_custom_call.1} parent=1 // pred_check
      _
    $region55: #{tpu_custom_call.1} parent=1 // pred_check_branch
      %140 = sbr.rel (0) target = $region57
    $region56: #{tpu_custom_call.1} parent=1 // pred_region
      _
    $region57: #{tpu_custom_call.1} parent=1 // pred_fallthru
      _
    // Predicated region
    $region58: #{tpu_custom_call.1} parent=1 // pred_check
      _
    $region59: #{tpu_custom_call.1} parent=1 // pred_check_branch
      %142 = sbr.rel (0) target = $region61
    $region60: #{tpu_custom_call.1} parent=1 // pred_region
      _
    $region61: #{tpu_custom_call.1} parent=1 // pred_fallthru
      _
    // Predicated region
    $region62: #{tpu_custom_call.1} parent=1 // pred_check
      _
    $region63: #{tpu_custom_call.1} parent=1 // pred_check_branch
      %144 = sbr.rel (0) target = $region65
    $region64: #{tpu_custom_call.1} parent=1 // pred_region
      %s146 = ssub.s32 2048, 2048
      %147 = vsyncadd [#allocation18], %s146
      %s148 = sshll.u32 [#allocation17], 4
      %s149 = int_to_ptr.vmem [resolvable:$true] %s148
      %154 = dma.hbm_to_vmem [thread:$0]  %s15, 2048, %s149, [#allocation18], 128, 128, 8
    $region65: #{tpu_custom_call.1} parent=1 // pred_fallthru
      _
    // Predicated region
    $region66: #{tpu_custom_call.1} parent=1 // pred_check
      _
    $region67: #{tpu_custom_call.1} parent=1 // pred_check_branch
      %156 = sbr.rel (0) target = $region69
    $region68: #{tpu_custom_call.1} parent=1 // pred_region
      _
    $region69: #{tpu_custom_call.1} parent=1 // pred_fallthru
      _
    // Predicated region
    $region70: #{tpu_custom_call.1} parent=1 // pred_check
      _
    $region71: #{tpu_custom_call.1} parent=1 // pred_check_branch
      %158 = sbr.rel (0) target = $region73
    $region72: #{tpu_custom_call.1} parent=1 // pred_region
      %159 = dma.done [#allocation3], 128
    $region73: #{tpu_custom_call.1} parent=1 // pred_fallthru
      _
    // Predicated region
    $region74: #{tpu_custom_call.1} parent=1 // pred_check
      _
    $region75: #{tpu_custom_call.1} parent=1 // pred_check_branch
      %161 = sbr.rel (0) target = $region77
    $region76: #{tpu_custom_call.1} parent=1 // pred_region
      %162 = dma.done [#allocation6], 128
    $region77: #{tpu_custom_call.1} parent=1 // pred_fallthru
      _
    // Predicated region
    $region78: #{tpu_custom_call.1} parent=1 // pred_check
      _
    $region79: #{tpu_custom_call.1} parent=1 // pred_check_branch
      %164 = sbr.rel (0) target = $region81
    $region80: #{tpu_custom_call.1} parent=1 // pred_region
      %165 = dma.done [#allocation6], 128
    $region81: #{tpu_custom_call.1} parent=1 // pred_fallthru
      _
    // Predicated region
    $region82: #{tpu_custom_call.1} parent=1 // pred_check
      _
    $region83: #{tpu_custom_call.1} parent=1 // pred_check_branch
      %167 = sbr.rel (0) target = $region85
    $region84: #{tpu_custom_call.1} parent=1 // pred_region
      %168 = dma.done [#allocation9], 2048
    $region85: #{tpu_custom_call.1} parent=1 // pred_fallthru
      _
    // Predicated region
    $region86: #{tpu_custom_call.1} parent=1 // pred_check
      _
    $region87: #{tpu_custom_call.1} parent=1 // pred_check_branch
      %170 = sbr.rel (0) target = $region89
    $region88: #{tpu_custom_call.1} parent=1 // pred_region
      %171 = dma.done [#allocation9], 2048
    $region89: #{tpu_custom_call.1} parent=1 // pred_fallthru
      _
    // Predicated region
    $region90: #{tpu_custom_call.1} parent=1 // pred_check
      _
    $region91: #{tpu_custom_call.1} parent=1 // pred_check_branch
      %173 = sbr.rel (0) target = $region93
    $region92: #{tpu_custom_call.1} parent=1 // pred_region
      %174 = dma.done [#allocation12], 2048
    $region93: #{tpu_custom_call.1} parent=1 // pred_fallthru
      _
    // Predicated region
    $region94: #{tpu_custom_call.1} parent=1 // pred_check
      _
    $region95: #{tpu_custom_call.1} parent=1 // pred_check_branch
      %176 = sbr.rel (0) target = $region97
    $region96: #{tpu_custom_call.1} parent=1 // pred_region
      %177 = dma.done [#allocation12], 2048
    $region97: #{tpu_custom_call.1} parent=1 // pred_fallthru
      _
    // Predicated region
    $region98: #{tpu_custom_call.1} parent=1 // pred_check
      _
    $region99: #{tpu_custom_call.1} parent=1 // pred_check_branch
      %179 = sbr.rel (0) target = $region101
    $region100: #{tpu_custom_call.1} parent=1 // pred_region
      %180 = dma.done [#allocation15], 2048
    $region101: #{tpu_custom_call.1} parent=1 // pred_fallthru
      _
    // Predicated region
    $region102: #{tpu_custom_call.1} parent=1 // pred_check
      _
    $region103: #{tpu_custom_call.1} parent=1 // pred_check_branch
      %182 = sbr.rel (0) target = $region105
    $region104: #{tpu_custom_call.1} parent=1 // pred_region
      %183 = dma.done [#allocation15], 2048
    $region105: #{tpu_custom_call.1} parent=1 // pred_fallthru
      _
    // Predicated region
    $region106: #{tpu_custom_call.1} parent=1 // pred_check
      _
    $region107: #{tpu_custom_call.1} parent=1 // pred_check_branch
      %185 = sbr.rel (0) target = $region109
    $region108: #{tpu_custom_call.1} parent=1 // pred_region
      %186 = dma.done [#allocation18], 2048
    $region109: #{tpu_custom_call.1} parent=1 // pred_fallthru
      _
    %v187 = vld [vmem:[#allocation7] sm:$0xff]
    %v188 = vld [vmem:[#allocation2] sm:$0xff]
    %v189 = vld [vmem:[#allocation5] sm:$0xff]
    %v190 = vld [vmem:[#allocation8] sm:$0xff]
    %v191 = vld [vmem:[#allocation8 + $0x8] sm:$0xff]
    %v192 = vld [vmem:[#allocation8 + $0x10] sm:$0xff]
    %v193 = vld [vmem:[#allocation8 + $0x18] sm:$0xff]
    %v194 = vld [vmem:[#allocation8 + $0x20] sm:$0xff]
    %v195 = vld [vmem:[#allocation8 + $0x28] sm:$0xff]
    %v196 = vld [vmem:[#allocation8 + $0x30] sm:$0xff]
    %v197 = vld [vmem:[#allocation8 + $0x38] sm:$0xff]
    %v198 = vld [vmem:[#allocation8 + $0x40] sm:$0xff]
    %v199 = vld [vmem:[#allocation8 + $0x48] sm:$0xff]
    %v200 = vld [vmem:[#allocation8 + $0x50] sm:$0xff]
    %v201 = vld [vmem:[#allocation8 + $0x58] sm:$0xff]
    %v202 = vld [vmem:[#allocation8 + $0x60] sm:$0xff]
    %v203 = vld [vmem:[#allocation8 + $0x68] sm:$0xff]
    %v204 = vld [vmem:[#allocation8 + $0x70] sm:$0xff]
    %v205 = vld [vmem:[#allocation8 + $0x78] sm:$0xff]
    %v206 = vld [vmem:[%s4] sm:$0x1]
    %v208 = vlaneseq
    %v209 = vshrl.u32 %v208, 7
    %v210 = vsub.s32 0, %v209
    %v211 = vrot.slane %v206, %v210
    %213 = vmatprep.subr.mxu0 0.0
    %214 = vmatpush1.msra.mxu0 %v190
    %215 = vmatprep.subr.mxu0 0.0
    %216 = vmatpush1.msra.mxu0 %v191
    %217 = vmatprep.subr.mxu0 0.0
    %218 = vmatpush1.msra.mxu0 %v192
    %219 = vmatprep.subr.mxu0 0.0
    %220 = vmatpush1.msra.mxu0 %v193
    %221 = vmatprep.subr.mxu0 0.0
    %222 = vmatpush1.msra.mxu0 %v194
    %223 = vmatprep.subr.mxu0 0.0
    %224 = vmatpush1.msra.mxu0 %v195
    %225 = vmatprep.subr.mxu0 0.0
    %226 = vmatpush1.msra.mxu0 %v196
    %227 = vmatprep.subr.mxu0 0.0
    %228 = vmatpush1.msra.mxu0 %v197
    %229 = vmatprep.subr.mxu0 0.0
    %230 = vmatpush1.msra.mxu0 %v198
    %231 = vmatprep.subr.mxu0 0.0
    %232 = vmatpush1.msra.mxu0 %v199
    %233 = vmatprep.subr.mxu0 0.0
    %234 = vmatpush1.msra.mxu0 %v200
    %235 = vmatprep.subr.mxu0 0.0
    %236 = vmatpush1.msra.mxu0 %v201
    %237 = vmatprep.subr.mxu0 0.0
    %238 = vmatpush1.msra.mxu0 %v202
    %239 = vmatprep.subr.mxu0 0.0
    %240 = vmatpush1.msra.mxu0 %v203
    %241 = vmatprep.subr.mxu0 0.0
    %242 = vmatpush1.msra.mxu0 %v204
    %243 = vmatprep.subr.mxu0 0.0
    %244 = vmatpush1.msra.mxu0 %v205
    %245 = vmatprep.subr.mxu0 0.0
    %246 = vmatpush1.msra.mxu0 0.0
    %247 = vmatprep.subr.mxu0 0.0
    %248 = vmatpush1.msra.mxu0 0.0
    %249 = vmatprep.subr.mxu0 0.0
    %250 = vmatpush1.msra.mxu0 0.0
    %251 = vmatprep.subr.mxu0 0.0
    %252 = vmatpush1.msra.mxu0 0.0
    %253 = vmatprep.subr.mxu0 0.0
    %254 = vmatpush1.msra.mxu0 0.0
    %255 = vmatprep.subr.mxu0 0.0
    %256 = vmatpush1.msra.mxu0 0.0
    %257 = vmatprep.subr.mxu0 0.0
    %258 = vmatpush1.msra.mxu0 0.0
    %259 = vmatprep.subr.mxu0 0.0
    %260 = vmatpush1.msra.mxu0 0.0
    %261 = vmatprep.subr.mxu0 0.0
    %262 = vmatpush1.msra.mxu0 0.0
    %263 = vmatprep.subr.mxu0 0.0
    %264 = vmatpush1.msra.mxu0 0.0
    %265 = vmatprep.subr.mxu0 0.0
    %266 = vmatpush1.msra.mxu0 0.0
    %267 = vmatprep.subr.mxu0 0.0
    %268 = vmatpush1.msra.mxu0 0.0
    %269 = vmatprep.subr.mxu0 0.0
    %270 = vmatpush1.msra.mxu0 0.0
    %271 = vmatprep.subr.mxu0 0.0
    %272 = vmatpush1.msra.mxu0 0.0
    %273 = vmatprep.subr.mxu0 0.0
    %274 = vmatpush1.msra.mxu0 0.0
    %275 = vmatprep.subr.mxu0 0.0
    %276 = vmatpush1.msra.mxu0 0.0
    %277 = vmatprep.mubr.f32.mxu0 0.0
    %278 = vmatmul.mubr.f32.gmra.mrb[0].mxu0 %v188
    %v279 = vpop.f32.mrb[0].mxu0
    %v280 = vadd.f32 %v211, %v279
    %v281 = vpop.f32.mrb[0].mxu0
    %282 = vdwg.mxu0
    %v283 = vmax.f32 %v280, 0.0
    %v284 = vld [vmem:[#allocation10] sm:$0xff]
    %v285 = vld [vmem:[#allocation10 + $0x8] sm:$0xff]
    %v286 = vld [vmem:[#allocation10 + $0x10] sm:$0xff]
    %v287 = vld [vmem:[#allocation10 + $0x18] sm:$0xff]
    %v288 = vld [vmem:[#allocation10 + $0x20] sm:$0xff]
    %v289 = vld [vmem:[#allocation10 + $0x28] sm:$0xff]
    %v290 = vld [vmem:[#allocation10 + $0x30] sm:$0xff]
    %v291 = vld [vmem:[#allocation10 + $0x38] sm:$0xff]
    %v292 = vld [vmem:[#allocation10 + $0x40] sm:$0xff]
    %v293 = vld [vmem:[#allocation10 + $0x48] sm:$0xff]
    %v294 = vld [vmem:[#allocation10 + $0x50] sm:$0xff]
    %v295 = vld [vmem:[#allocation10 + $0x58] sm:$0xff]
    %v296 = vld [vmem:[#allocation10 + $0x60] sm:$0xff]
    %v297 = vld [vmem:[#allocation10 + $0x68] sm:$0xff]
    %v298 = vld [vmem:[#allocation10 + $0x70] sm:$0xff]
    %v299 = vld [vmem:[#allocation10 + $0x78] sm:$0xff]
    %v300 = vld [vmem:[%s6] sm:$0x1]
    %v302 = vlaneseq
    %v303 = vshrl.u32 %v302, 7
    %v304 = vsub.s32 0, %v303
    %v305 = vrot.slane %v300, %v304
    %307 = vmatprep.subr.mxu0 0.0
    %308 = vmatpush1.msra.mxu0 %v284
    %309 = vmatprep.subr.mxu0 0.0
    %310 = vmatpush1.msra.mxu0 %v285
    %311 = vmatprep.subr.mxu0 0.0
    %312 = vmatpush1.msra.mxu0 %v286
    %313 = vmatprep.subr.mxu0 0.0
    %314 = vmatpush1.msra.mxu0 %v287
    %315 = vmatprep.subr.mxu0 0.0
    %316 = vmatpush1.msra.mxu0 %v288
    %317 = vmatprep.subr.mxu0 0.0
    %318 = vmatpush1.msra.mxu0 %v289
    %319 = vmatprep.subr.mxu0 0.0
    %320 = vmatpush1.msra.mxu0 %v290
    %321 = vmatprep.subr.mxu0 0.0
    %322 = vmatpush1.msra.mxu0 %v291
    %323 = vmatprep.subr.mxu0 0.0
    %324 = vmatpush1.msra.mxu0 %v292
    %325 = vmatprep.subr.mxu0 0.0
    %326 = vmatpush1.msra.mxu0 %v293
    %327 = vmatprep.subr.mxu0 0.0
    %328 = vmatpush1.msra.mxu0 %v294
    %329 = vmatprep.subr.mxu0 0.0
    %330 = vmatpush1.msra.mxu0 %v295
    %331 = vmatprep.subr.mxu0 0.0
    %332 = vmatpush1.msra.mxu0 %v296
    %333 = vmatprep.subr.mxu0 0.0
    %334 = vmatpush1.msra.mxu0 %v297
    %335 = vmatprep.subr.mxu0 0.0
    %336 = vmatpush1.msra.mxu0 %v298
    %337 = vmatprep.subr.mxu0 0.0
    %338 = vmatpush1.msra.mxu0 %v299
    %339 = vmatprep.subr.mxu0 0.0
    %340 = vmatpush1.msra.mxu0 0.0
    %341 = vmatprep.subr.mxu0 0.0
    %342 = vmatpush1.msra.mxu0 0.0
    %343 = vmatprep.subr.mxu0 0.0
    %344 = vmatpush1.msra.mxu0 0.0
    %345 = vmatprep.subr.mxu0 0.0
    %346 = vmatpush1.msra.mxu0 0.0
    %347 = vmatprep.subr.mxu0 0.0
    %348 = vmatpush1.msra.mxu0 0.0
    %349 = vmatprep.subr.mxu0 0.0
    %350 = vmatpush1.msra.mxu0 0.0
    %351 = vmatprep.subr.mxu0 0.0
    %352 = vmatpush1.msra.mxu0 0.0
    %353 = vmatprep.subr.mxu0 0.0
    %354 = vmatpush1.msra.mxu0 0.0
    %355 = vmatprep.subr.mxu0 0.0
    %356 = vmatpush1.msra.mxu0 0.0
    %357 = vmatprep.subr.mxu0 0.0
    %358 = vmatpush1.msra.mxu0 0.0
    %359 = vmatprep.subr.mxu0 0.0
    %360 = vmatpush1.msra.mxu0 0.0
    %361 = vmatprep.subr.mxu0 0.0
    %362 = vmatpush1.msra.mxu0 0.0
    %363 = vmatprep.subr.mxu0 0.0
    %364 = vmatpush1.msra.mxu0 0.0
    %365 = vmatprep.subr.mxu0 0.0
    %366 = vmatpush1.msra.mxu0 0.0
    %367 = vmatprep.subr.mxu0 0.0
    %368 = vmatpush1.msra.mxu0 0.0
    %369 = vmatprep.subr.mxu0 0.0
    %370 = vmatpush1.msra.mxu0 0.0
    %371 = vmatprep.mubr.f32.mxu0 0.0
    %372 = vmatmul.mubr.f32.gmra.mrb[0].mxu0 %v283
    %v373 = vpop.f32.mrb[0].mxu0
    %v374 = vadd.f32 %v305, %v373
    %v375 = vpop.f32.mrb[0].mxu0
    %376 = vdwg.mxu0
    %v377 = vld [vmem:[#allocation11] sm:$0xff]
    %v378 = vld [vmem:[#allocation11 + $0x8] sm:$0xff]
    %v379 = vld [vmem:[#allocation11 + $0x10] sm:$0xff]
    %v380 = vld [vmem:[#allocation11 + $0x18] sm:$0xff]
    %v381 = vld [vmem:[#allocation11 + $0x20] sm:$0xff]
    %v382 = vld [vmem:[#allocation11 + $0x28] sm:$0xff]
    %v383 = vld [vmem:[#allocation11 + $0x30] sm:$0xff]
    %v384 = vld [vmem:[#allocation11 + $0x38] sm:$0xff]
    %v385 = vld [vmem:[#allocation11 + $0x40] sm:$0xff]
    %v386 = vld [vmem:[#allocation11 + $0x48] sm:$0xff]
    %v387 = vld [vmem:[#allocation11 + $0x50] sm:$0xff]
    %v388 = vld [vmem:[#allocation11 + $0x58] sm:$0xff]
    %v389 = vld [vmem:[#allocation11 + $0x60] sm:$0xff]
    %v390 = vld [vmem:[#allocation11 + $0x68] sm:$0xff]
    %v391 = vld [vmem:[#allocation11 + $0x70] sm:$0xff]
    %v392 = vld [vmem:[#allocation11 + $0x78] sm:$0xff]
    %v393 = vld [vmem:[%s8] sm:$0x1]
    %v395 = vlaneseq
    %v396 = vshrl.u32 %v395, 7
    %v397 = vsub.s32 0, %v396
    %v398 = vrot.slane %v393, %v397
    %400 = vmatprep.subr.mxu0 0.0
    %401 = vmatpush1.msra.mxu0 %v377
    %402 = vmatprep.subr.mxu0 0.0
    %403 = vmatpush1.msra.mxu0 %v378
    %404 = vmatprep.subr.mxu0 0.0
    %405 = vmatpush1.msra.mxu0 %v379
    %406 = vmatprep.subr.mxu0 0.0
    %407 = vmatpush1.msra.mxu0 %v380
    %408 = vmatprep.subr.mxu0 0.0
    %409 = vmatpush1.msra.mxu0 %v381
    %410 = vmatprep.subr.mxu0 0.0
    %411 = vmatpush1.msra.mxu0 %v382
    %412 = vmatprep.subr.mxu0 0.0
    %413 = vmatpush1.msra.mxu0 %v383
    %414 = vmatprep.subr.mxu0 0.0
    %415 = vmatpush1.msra.mxu0 %v384
    %416 = vmatprep.subr.mxu0 0.0
    %417 = vmatpush1.msra.mxu0 %v385
    %418 = vmatprep.subr.mxu0 0.0
    %419 = vmatpush1.msra.mxu0 %v386
    %420 = vmatprep.subr.mxu0 0.0
    %421 = vmatpush1.msra.mxu0 %v387
    %422 = vmatprep.subr.mxu0 0.0
    %423 = vmatpush1.msra.mxu0 %v388
    %424 = vmatprep.subr.mxu0 0.0
    %425 = vmatpush1.msra.mxu0 %v389
    %426 = vmatprep.subr.mxu0 0.0
    %427 = vmatpush1.msra.mxu0 %v390
    %428 = vmatprep.subr.mxu0 0.0
    %429 = vmatpush1.msra.mxu0 %v391
    %430 = vmatprep.subr.mxu0 0.0
    %431 = vmatpush1.msra.mxu0 %v392
    %432 = vmatprep.subr.mxu0 0.0
    %433 = vmatpush1.msra.mxu0 0.0
    %434 = vmatprep.subr.mxu0 0.0
    %435 = vmatpush1.msra.mxu0 0.0
    %436 = vmatprep.subr.mxu0 0.0
    %437 = vmatpush1.msra.mxu0 0.0
    %438 = vmatprep.subr.mxu0 0.0
    %439 = vmatpush1.msra.mxu0 0.0
    %440 = vmatprep.subr.mxu0 0.0
    %441 = vmatpush1.msra.mxu0 0.0
    %442 = vmatprep.subr.mxu0 0.0
    %443 = vmatpush1.msra.mxu0 0.0
    %444 = vmatprep.subr.mxu0 0.0
    %445 = vmatpush1.msra.mxu0 0.0
    %446 = vmatprep.subr.mxu0 0.0
    %447 = vmatpush1.msra.mxu0 0.0
    %448 = vmatprep.subr.mxu0 0.0
    %449 = vmatpush1.msra.mxu0 0.0
    %450 = vmatprep.subr.mxu0 0.0
    %451 = vmatpush1.msra.mxu0 0.0
    %452 = vmatprep.subr.mxu0 0.0
    %453 = vmatpush1.msra.mxu0 0.0
    %454 = vmatprep.subr.mxu0 0.0
    %455 = vmatpush1.msra.mxu0 0.0
    %456 = vmatprep.subr.mxu0 0.0
    %457 = vmatpush1.msra.mxu0 0.0
    %458 = vmatprep.subr.mxu0 0.0
    %459 = vmatpush1.msra.mxu0 0.0
    %460 = vmatprep.subr.mxu0 0.0
    %461 = vmatpush1.msra.mxu0 0.0
    %462 = vmatprep.subr.mxu0 0.0
    %463 = vmatpush1.msra.mxu0 0.0
    %464 = vmatprep.mubr.f32.mxu0 0.0
    %465 = vmatmul.mubr.f32.gmra.mrb[0].mxu0 %v189
    %v466 = vpop.f32.mrb[0].mxu0
    %v467 = vadd.f32 %v398, %v466
    %v468 = vpop.f32.mrb[0].mxu0
    %469 = vdwg.mxu0
    %v470 = vmax.f32 %v467, 0.0
    %v471 = vld [vmem:[#allocation13] sm:$0xff]
    %v472 = vld [vmem:[#allocation13 + $0x8] sm:$0xff]
    %v473 = vld [vmem:[#allocation13 + $0x10] sm:$0xff]
    %v474 = vld [vmem:[#allocation13 + $0x18] sm:$0xff]
    %v475 = vld [vmem:[#allocation13 + $0x20] sm:$0xff]
    %v476 = vld [vmem:[#allocation13 + $0x28] sm:$0xff]
    %v477 = vld [vmem:[#allocation13 + $0x30] sm:$0xff]
    %v478 = vld [vmem:[#allocation13 + $0x38] sm:$0xff]
    %v479 = vld [vmem:[#allocation13 + $0x40] sm:$0xff]
    %v480 = vld [vmem:[#allocation13 + $0x48] sm:$0xff]
    %v481 = vld [vmem:[#allocation13 + $0x50] sm:$0xff]
    %v482 = vld [vmem:[#allocation13 + $0x58] sm:$0xff]
    %v483 = vld [vmem:[#allocation13 + $0x60] sm:$0xff]
    %v484 = vld [vmem:[#allocation13 + $0x68] sm:$0xff]
    %v485 = vld [vmem:[#allocation13 + $0x70] sm:$0xff]
    %v486 = vld [vmem:[#allocation13 + $0x78] sm:$0xff]
    %v487 = vld [vmem:[%s10] sm:$0x1]
    %v489 = vlaneseq
    %v490 = vshrl.u32 %v489, 7
    %v491 = vsub.s32 0, %v490
    %v492 = vrot.slane %v487, %v491
    %494 = vmatprep.subr.mxu0 0.0
    %495 = vmatpush1.msra.mxu0 %v471
    %496 = vmatprep.subr.mxu0 0.0
    %497 = vmatpush1.msra.mxu0 %v472
    %498 = vmatprep.subr.mxu0 0.0
    %499 = vmatpush1.msra.mxu0 %v473
    %500 = vmatprep.subr.mxu0 0.0
    %501 = vmatpush1.msra.mxu0 %v474
    %502 = vmatprep.subr.mxu0 0.0
    %503 = vmatpush1.msra.mxu0 %v475
    %504 = vmatprep.subr.mxu0 0.0
    %505 = vmatpush1.msra.mxu0 %v476
    %506 = vmatprep.subr.mxu0 0.0
    %507 = vmatpush1.msra.mxu0 %v477
    %508 = vmatprep.subr.mxu0 0.0
    %509 = vmatpush1.msra.mxu0 %v478
    %510 = vmatprep.subr.mxu0 0.0
    %511 = vmatpush1.msra.mxu0 %v479
    %512 = vmatprep.subr.mxu0 0.0
    %513 = vmatpush1.msra.mxu0 %v480
    %514 = vmatprep.subr.mxu0 0.0
    %515 = vmatpush1.msra.mxu0 %v481
    %516 = vmatprep.subr.mxu0 0.0
    %517 = vmatpush1.msra.mxu0 %v482
    %518 = vmatprep.subr.mxu0 0.0
    %519 = vmatpush1.msra.mxu0 %v483
    %520 = vmatprep.subr.mxu0 0.0
    %521 = vmatpush1.msra.mxu0 %v484
    %522 = vmatprep.subr.mxu0 0.0
    %523 = vmatpush1.msra.mxu0 %v485
    %524 = vmatprep.subr.mxu0 0.0
    %525 = vmatpush1.msra.mxu0 %v486
    %526 = vmatprep.subr.mxu0 0.0
    %527 = vmatpush1.msra.mxu0 0.0
    %528 = vmatprep.subr.mxu0 0.0
    %529 = vmatpush1.msra.mxu0 0.0
    %530 = vmatprep.subr.mxu0 0.0
    %531 = vmatpush1.msra.mxu0 0.0
    %532 = vmatprep.subr.mxu0 0.0
    %533 = vmatpush1.msra.mxu0 0.0
    %534 = vmatprep.subr.mxu0 0.0
    %535 = vmatpush1.msra.mxu0 0.0
    %536 = vmatprep.subr.mxu0 0.0
    %537 = vmatpush1.msra.mxu0 0.0
    %538 = vmatprep.subr.mxu0 0.0
    %539 = vmatpush1.msra.mxu0 0.0
    %540 = vmatprep.subr.mxu0 0.0
    %541 = vmatpush1.msra.mxu0 0.0
    %542 = vmatprep.subr.mxu0 0.0
    %543 = vmatpush1.msra.mxu0 0.0
    %544 = vmatprep.subr.mxu0 0.0
    %545 = vmatpush1.msra.mxu0 0.0
    %546 = vmatprep.subr.mxu0 0.0
    %547 = vmatpush1.msra.mxu0 0.0
    %548 = vmatprep.subr.mxu0 0.0
    %549 = vmatpush1.msra.mxu0 0.0
    %550 = vmatprep.subr.mxu0 0.0
    %551 = vmatpush1.msra.mxu0 0.0
    %552 = vmatprep.subr.mxu0 0.0
    %553 = vmatpush1.msra.mxu0 0.0
    %554 = vmatprep.subr.mxu0 0.0
    %555 = vmatpush1.msra.mxu0 0.0
    %556 = vmatprep.subr.mxu0 0.0
    %557 = vmatpush1.msra.mxu0 0.0
    %558 = vmatprep.mubr.f32.mxu0 0.0
    %559 = vmatmul.mubr.f32.gmra.mrb[0].mxu0 %v470
    %v560 = vpop.f32.mrb[0].mxu0
    %v561 = vadd.f32 %v492, %v560
    %v562 = vpop.f32.mrb[0].mxu0
    %563 = vdwg.mxu0
    %v564 = vld [vmem:[#allocation14] sm:$0xff]
    %v565 = vld [vmem:[#allocation14 + $0x8] sm:$0xff]
    %v566 = vld [vmem:[#allocation14 + $0x10] sm:$0xff]
    %v567 = vld [vmem:[#allocation14 + $0x18] sm:$0xff]
    %v568 = vld [vmem:[#allocation14 + $0x20] sm:$0xff]
    %v569 = vld [vmem:[#allocation14 + $0x28] sm:$0xff]
    %v570 = vld [vmem:[#allocation14 + $0x30] sm:$0xff]
    %v571 = vld [vmem:[#allocation14 + $0x38] sm:$0xff]
    %v572 = vld [vmem:[#allocation14 + $0x40] sm:$0xff]
    %v573 = vld [vmem:[#allocation14 + $0x48] sm:$0xff]
    %v574 = vld [vmem:[#allocation14 + $0x50] sm:$0xff]
    %v575 = vld [vmem:[#allocation14 + $0x58] sm:$0xff]
    %v576 = vld [vmem:[#allocation14 + $0x60] sm:$0xff]
    %v577 = vld [vmem:[#allocation14 + $0x68] sm:$0xff]
    %v578 = vld [vmem:[#allocation14 + $0x70] sm:$0xff]
    %v579 = vld [vmem:[#allocation14 + $0x78] sm:$0xff]
    %v580 = vld [vmem:[#allocation16] sm:$0xff]
    %v581 = vld [vmem:[#allocation16 + $0x8] sm:$0xff]
    %v582 = vld [vmem:[#allocation16 + $0x10] sm:$0xff]
    %v583 = vld [vmem:[#allocation16 + $0x18] sm:$0xff]
    %v584 = vld [vmem:[#allocation16 + $0x20] sm:$0xff]
    %v585 = vld [vmem:[#allocation16 + $0x28] sm:$0xff]
    %v586 = vld [vmem:[#allocation16 + $0x30] sm:$0xff]
    %v587 = vld [vmem:[#allocation16 + $0x38] sm:$0xff]
    %v588 = vld [vmem:[#allocation16 + $0x40] sm:$0xff]
    %v589 = vld [vmem:[#allocation16 + $0x48] sm:$0xff]
    %v590 = vld [vmem:[#allocation16 + $0x50] sm:$0xff]
    %v591 = vld [vmem:[#allocation16 + $0x58] sm:$0xff]
    %v592 = vld [vmem:[#allocation16 + $0x60] sm:$0xff]
    %v593 = vld [vmem:[#allocation16 + $0x68] sm:$0xff]
    %v594 = vld [vmem:[#allocation16 + $0x70] sm:$0xff]
    %v595 = vld [vmem:[#allocation16 + $0x78] sm:$0xff]
    %596 = vmatprep.subr.mxu0 0.0
    %597 = vmatpush1.msra.mxu0 %v580
    %598 = vmatprep.subr.mxu0 0.0
    %599 = vmatpush1.msra.mxu0 %v581
    %600 = vmatprep.subr.mxu0 0.0
    %601 = vmatpush1.msra.mxu0 %v582
    %602 = vmatprep.subr.mxu0 0.0
    %603 = vmatpush1.msra.mxu0 %v583
    %604 = vmatprep.subr.mxu0 0.0
    %605 = vmatpush1.msra.mxu0 %v584
    %606 = vmatprep.subr.mxu0 0.0
    %607 = vmatpush1.msra.mxu0 %v585
    %608 = vmatprep.subr.mxu0 0.0
    %609 = vmatpush1.msra.mxu0 %v586
    %610 = vmatprep.subr.mxu0 0.0
    %611 = vmatpush1.msra.mxu0 %v587
    %612 = vmatprep.subr.mxu0 0.0
    %613 = vmatpush1.msra.mxu0 %v588
    %614 = vmatprep.subr.mxu0 0.0
    %615 = vmatpush1.msra.mxu0 %v589
    %616 = vmatprep.subr.mxu0 0.0
    %617 = vmatpush1.msra.mxu0 %v590
    %618 = vmatprep.subr.mxu0 0.0
    %619 = vmatpush1.msra.mxu0 %v591
    %620 = vmatprep.subr.mxu0 0.0
    %621 = vmatpush1.msra.mxu0 %v592
    %622 = vmatprep.subr.mxu0 0.0
    %623 = vmatpush1.msra.mxu0 %v593
    %624 = vmatprep.subr.mxu0 0.0
    %625 = vmatpush1.msra.mxu0 %v594
    %626 = vmatprep.subr.mxu0 0.0
    %627 = vmatpush1.msra.mxu0 %v595
    %628 = vmatprep.subr.mxu0 0.0
    %629 = vmatpush1.msra.mxu0 0.0
    %630 = vmatprep.subr.mxu0 0.0
    %631 = vmatpush1.msra.mxu0 0.0
    %632 = vmatprep.subr.mxu0 0.0
    %633 = vmatpush1.msra.mxu0 0.0
    %634 = vmatprep.subr.mxu0 0.0
    %635 = vmatpush1.msra.mxu0 0.0
    %636 = vmatprep.subr.mxu0 0.0
    %637 = vmatpush1.msra.mxu0 0.0
    %638 = vmatprep.subr.mxu0 0.0
    %639 = vmatpush1.msra.mxu0 0.0
    %640 = vmatprep.subr.mxu0 0.0
    %641 = vmatpush1.msra.mxu0 0.0
    %642 = vmatprep.subr.mxu0 0.0
    %643 = vmatpush1.msra.mxu0 0.0
    %644 = vmatprep.subr.mxu0 0.0
    %645 = vmatpush1.msra.mxu0 0.0
    %646 = vmatprep.subr.mxu0 0.0
    %647 = vmatpush1.msra.mxu0 0.0
    %648 = vmatprep.subr.mxu0 0.0
    %649 = vmatpush1.msra.mxu0 0.0
    %650 = vmatprep.subr.mxu0 0.0
    %651 = vmatpush1.msra.mxu0 0.0
    %652 = vmatprep.subr.mxu0 0.0
    %653 = vmatpush1.msra.mxu0 0.0
    %654 = vmatprep.subr.mxu0 0.0
    %655 = vmatpush1.msra.mxu0 0.0
    %656 = vmatprep.subr.mxu0 0.0
    %657 = vmatpush1.msra.mxu0 0.0
    %658 = vmatprep.subr.mxu0 0.0
    %659 = vmatpush1.msra.mxu0 0.0
    %660 = vmatprep.mubr.f32.mxu0 0.0
    %661 = vmatmul.mubr.f32.gmra.mrb[0].mxu0 %v561
    %v662 = vpop.f32.mrb[0].mxu0
    %v663 = vadd.f32 0.0, %v662
    %v664 = vpop.f32.mrb[0].mxu0
    %665 = vdwg.mxu0
    %666 = vmatprep.subr.mxu0 0.0
    %667 = vmatpush1.msra.mxu0 %v564
    %668 = vmatprep.subr.mxu0 0.0
    %669 = vmatpush1.msra.mxu0 %v565
    %670 = vmatprep.subr.mxu0 0.0
    %671 = vmatpush1.msra.mxu0 %v566
    %672 = vmatprep.subr.mxu0 0.0
    %673 = vmatpush1.msra.mxu0 %v567
    %674 = vmatprep.subr.mxu0 0.0
    %675 = vmatpush1.msra.mxu0 %v568
    %676 = vmatprep.subr.mxu0 0.0
    %677 = vmatpush1.msra.mxu0 %v569
    %678 = vmatprep.subr.mxu0 0.0
    %679 = vmatpush1.msra.mxu0 %v570
    %680 = vmatprep.subr.mxu0 0.0
    %681 = vmatpush1.msra.mxu0 %v571
    %682 = vmatprep.subr.mxu0 0.0
    %683 = vmatpush1.msra.mxu0 %v572
    %684 = vmatprep.subr.mxu0 0.0
    %685 = vmatpush1.msra.mxu0 %v573
    %686 = vmatprep.subr.mxu0 0.0
    %687 = vmatpush1.msra.mxu0 %v574
    %688 = vmatprep.subr.mxu0 0.0
    %689 = vmatpush1.msra.mxu0 %v575
    %690 = vmatprep.subr.mxu0 0.0
    %691 = vmatpush1.msra.mxu0 %v576
    %692 = vmatprep.subr.mxu0 0.0
    %693 = vmatpush1.msra.mxu0 %v577
    %694 = vmatprep.subr.mxu0 0.0
    %695 = vmatpush1.msra.mxu0 %v578
    %696 = vmatprep.subr.mxu0 0.0
    %697 = vmatpush1.msra.mxu0 %v579
    %698 = vmatprep.subr.mxu0 0.0
    %699 = vmatpush1.msra.mxu0 0.0
    %700 = vmatprep.subr.mxu0 0.0
    %701 = vmatpush1.msra.mxu0 0.0
    %702 = vmatprep.subr.mxu0 0.0
    %703 = vmatpush1.msra.mxu0 0.0
    %704 = vmatprep.subr.mxu0 0.0
    %705 = vmatpush1.msra.mxu0 0.0
    %706 = vmatprep.subr.mxu0 0.0
    %707 = vmatpush1.msra.mxu0 0.0
    %708 = vmatprep.subr.mxu0 0.0
    %709 = vmatpush1.msra.mxu0 0.0
    %710 = vmatprep.subr.mxu0 0.0
    %711 = vmatpush1.msra.mxu0 0.0
    %712 = vmatprep.subr.mxu0 0.0
    %713 = vmatpush1.msra.mxu0 0.0
    %714 = vmatprep.subr.mxu0 0.0
    %715 = vmatpush1.msra.mxu0 0.0
    %716 = vmatprep.subr.mxu0 0.0
    %717 = vmatpush1.msra.mxu0 0.0
    %718 = vmatprep.subr.mxu0 0.0
    %719 = vmatpush1.msra.mxu0 0.0
    %720 = vmatprep.subr.mxu0 0.0
    %721 = vmatpush1.msra.mxu0 0.0
    %722 = vmatprep.subr.mxu0 0.0
    %723 = vmatpush1.msra.mxu0 0.0
    %724 = vmatprep.subr.mxu0 0.0
    %725 = vmatpush1.msra.mxu0 0.0
    %726 = vmatprep.subr.mxu0 0.0
    %727 = vmatpush1.msra.mxu0 0.0
    %728 = vmatprep.subr.mxu0 0.0
    %729 = vmatpush1.msra.mxu0 0.0
    %730 = vmatprep.mubr.f32.mxu0 0.0
    %731 = vmatmul.mubr.f32.gmra.mrb[0].mxu0 %v374
    %v732 = vpop.f32.mrb[0].mxu0
    %v733 = vadd.f32 %v663, %v732
    %v734 = vpop.f32.mrb[0].mxu0
    %735 = vdwg.mxu0
    %v736 = vld [vmem:[%s13] sm:$0x1]
    %738 = vset.pattern.permute.xlu0 0
    %739 = vperm.xlu0 %738, %v187
    %v740 = vpop.permute.xlu0 %739
    %v743 = vlaneseq
    %v744 = vshrl.u32 %v743, 7
    %v745 = vsub.s32 0, %v744
    %v746 = vrot.slane %v736, %v745
    %v748 = vmul.f32 %v740, %v746
    %v749 = vadd.f32 %v733, %v748
    %v750 = vld [vmem:[%s14] sm:$0x1]
    %v752 = vlaneseq
    %v753 = vshrl.u32 %v752, 7
    %v754 = vsub.s32 0, %v753
    %v755 = vrot.slane %v750, %v754
    %v757 = vadd.f32 %v749, %v755
    %v758 = vmax.f32 %v757, 0.0
    %v759 = vld [vmem:[#allocation17] sm:$0xff]
    %v760 = vld [vmem:[#allocation17 + $0x8] sm:$0xff]
    %v761 = vld [vmem:[#allocation17 + $0x10] sm:$0xff]
    %v762 = vld [vmem:[#allocation17 + $0x18] sm:$0xff]
    %v763 = vld [vmem:[#allocation17 + $0x20] sm:$0xff]
    %v764 = vld [vmem:[#allocation17 + $0x28] sm:$0xff]
    %v765 = vld [vmem:[#allocation17 + $0x30] sm:$0xff]
    %v766 = vld [vmem:[#allocation17 + $0x38] sm:$0xff]
    %v767 = vld [vmem:[#allocation17 + $0x40] sm:$0xff]
    %v768 = vld [vmem:[#allocation17 + $0x48] sm:$0xff]
    %v769 = vld [vmem:[#allocation17 + $0x50] sm:$0xff]
    %v770 = vld [vmem:[#allocation17 + $0x58] sm:$0xff]
    %v771 = vld [vmem:[#allocation17 + $0x60] sm:$0xff]
    %v772 = vld [vmem:[#allocation17 + $0x68] sm:$0xff]
    %v773 = vld [vmem:[#allocation17 + $0x70] sm:$0xff]
    %v774 = vld [vmem:[#allocation17 + $0x78] sm:$0xff]
    %v775 = vld [vmem:[%s16] sm:$0x1]
    %v777 = vlaneseq
    %v778 = vshrl.u32 %v777, 7
    %v779 = vsub.s32 0, %v778
    %v780 = vrot.slane %v775, %v779
    %782 = vmatprep.subr.mxu0 0.0
    %783 = vmatpush1.msra.mxu0 %v759
    %784 = vmatprep.subr.mxu0 0.0
    %785 = vmatpush1.msra.mxu0 %v760
    %786 = vmatprep.subr.mxu0 0.0
    %787 = vmatpush1.msra.mxu0 %v761
    %788 = vmatprep.subr.mxu0 0.0
    %789 = vmatpush1.msra.mxu0 %v762
    %790 = vmatprep.subr.mxu0 0.0
    %791 = vmatpush1.msra.mxu0 %v763
    %792 = vmatprep.subr.mxu0 0.0
    %793 = vmatpush1.msra.mxu0 %v764
    %794 = vmatprep.subr.mxu0 0.0
    %795 = vmatpush1.msra.mxu0 %v765
    %796 = vmatprep.subr.mxu0 0.0
    %797 = vmatpush1.msra.mxu0 %v766
    %798 = vmatprep.subr.mxu0 0.0
    %799 = vmatpush1.msra.mxu0 %v767
    %800 = vmatprep.subr.mxu0 0.0
    %801 = vmatpush1.msra.mxu0 %v768
    %802 = vmatprep.subr.mxu0 0.0
    %803 = vmatpush1.msra.mxu0 %v769
    %804 = vmatprep.subr.mxu0 0.0
    %805 = vmatpush1.msra.mxu0 %v770
    %806 = vmatprep.subr.mxu0 0.0
    %807 = vmatpush1.msra.mxu0 %v771
    %808 = vmatprep.subr.mxu0 0.0
    %809 = vmatpush1.msra.mxu0 %v772
    %810 = vmatprep.subr.mxu0 0.0
    %811 = vmatpush1.msra.mxu0 %v773
    %812 = vmatprep.subr.mxu0 0.0
    %813 = vmatpush1.msra.mxu0 %v774
    %814 = vmatprep.subr.mxu0 0.0
    %815 = vmatpush1.msra.mxu0 0.0
    %816 = vmatprep.subr.mxu0 0.0
    %817 = vmatpush1.msra.mxu0 0.0
    %818 = vmatprep.subr.mxu0 0.0
    %819 = vmatpush1.msra.mxu0 0.0
    %820 = vmatprep.subr.mxu0 0.0
    %821 = vmatpush1.msra.mxu0 0.0
    %822 = vmatprep.subr.mxu0 0.0
    %823 = vmatpush1.msra.mxu0 0.0
    %824 = vmatprep.subr.mxu0 0.0
    %825 = vmatpush1.msra.mxu0 0.0
    %826 = vmatprep.subr.mxu0 0.0
    %827 = vmatpush1.msra.mxu0 0.0
    %828 = vmatprep.subr.mxu0 0.0
    %829 = vmatpush1.msra.mxu0 0.0
    %830 = vmatprep.subr.mxu0 0.0
    %831 = vmatpush1.msra.mxu0 0.0
    %832 = vmatprep.subr.mxu0 0.0
    %833 = vmatpush1.msra.mxu0 0.0
    %834 = vmatprep.subr.mxu0 0.0
    %835 = vmatpush1.msra.mxu0 0.0
    %836 = vmatprep.subr.mxu0 0.0
    %837 = vmatpush1.msra.mxu0 0.0
    %838 = vmatprep.subr.mxu0 0.0
    %839 = vmatpush1.msra.mxu0 0.0
    %840 = vmatprep.subr.mxu0 0.0
    %841 = vmatpush1.msra.mxu0 0.0
    %842 = vmatprep.subr.mxu0 0.0
    %843 = vmatpush1.msra.mxu0 0.0
    %844 = vmatprep.subr.mxu0 0.0
    %845 = vmatpush1.msra.mxu0 0.0
    %846 = vmatprep.mubr.f32.mxu0 0.0
    %847 = vmatmul.mubr.f32.gmra.mrb[0].mxu0 %v758
    %v848 = vpop.f32.mrb[0].mxu0
    %v849 = vadd.f32 %v780, %v848
    %v850 = vpop.f32.mrb[0].mxu0
    %851 = vdwg.mxu0
    %852 = vst [vmem:[#allocation19] sm:$0xff] %v849
    // Predicated region
    $region110: #{tpu_custom_call.1} parent=1 // pred_check
      _
    $region111: #{tpu_custom_call.1} parent=1 // pred_check_branch
      %854 = sbr.rel (0) target = $region113
    $region112: #{tpu_custom_call.1} parent=1 // pred_region
      %s856 = ssub.s32 128, 128
      %857 = vsyncadd [#allocation4], %s856
      %s859 = sshll.u32 [#allocation19], 4
      %s860 = int_to_ptr.vmem [resolvable:$true] %s859
      %862 = dma.vmem_to_hbm [thread:$0]  %s860, 128, %s17, [#allocation4]
    $region113: #{tpu_custom_call.1} parent=1 // pred_fallthru
      _
    // Predicated region
    $region114: #{tpu_custom_call.1} parent=1 // pred_check
      _
    $region115: #{tpu_custom_call.1} parent=1 // pred_check_branch
      %864 = sbr.rel (0) target = $region117
    $region116: #{tpu_custom_call.1} parent=1 // pred_region
      %865 = dma.done [#allocation4], 128
    $region117: #{tpu_custom_call.1} parent=1 // pred_fallthru
      _
    %866 = vsyncpa [#allocation3], 1
    %867 = vsyncpa [#allocation6], 1
    %868 = vsyncpa [#allocation9], 1
    %869 = vsyncpa [#allocation12], 1
    %870 = vsyncpa [#allocation15], 1
    %871 = vsyncpa [#allocation18], 1
    %872 = vsyncpa [#allocation4], 1

</llo_original>
